<compile_context>
chip_gen: v7x
topology: tpu7x:2x2x1
jax: 0.10.0
libtpu: 0.0.40
codegen_flags: <defaults>
</compile_context>

<pallas_src>
import functools

import jax
import jax.numpy as jnp
from jax.experimental import pallas as pl
from jax.experimental.pallas import tpu as pltpu

TEMPERATURE = 0.1
LAMBDA_CROSS_CONTRAST = 1.0
DIR_POS_PAIR_WEIGHT = 1.0

# TODO(synk): hard_neg_weights in {'linear','topk','exp'} (incl. torch.topk + scatter_)
# is not implemented; this kernel covers the default 'none' configuration only.
# TODO(synk): bf16 exp on the EUP (v6e/v7x) would further shorten the critical path but
# exceeds the reference tolerance; left out deliberately.


def _ahnp_tile_kernel(img_n_ref, ts_n_ref, img_nt_ref, ts_nt_ref,
                      lab_col_ref, lab_row_ref, out_ref, *,
                      temperature, dir_pos_pair_weight, scale):
    """One anchor row-tile: both contrastive directions for rows [i*TB, (i+1)*TB)."""
    tb = lab_col_ref.shape[0]
    b = lab_row_ref.shape[1]
    row0 = pl.multiple_of(pl.program_id(0) * tb, tb)
    inv_temp = jnp.float32(1.0 / temperature)

    # Anchors are sliced out of the resident, already-normalized projections, so
    # each projection is read from HBM exactly once (no separate anchor stream).
    img_anchor = img_n_ref[pl.ds(row0, tb), :]   # [TB, D]
    ts_anchor = ts_n_ref[pl.ds(row0, tb), :]     # [TB, D]

    # Supervised-contrastive mask for this tile (rows = global anchors, cols = keys).
    mask = (lab_col_ref[...] == lab_row_ref[...]).astype(jnp.float32)    # [TB, B]
    if dir_pos_pair_weight != 1.0:
        # fill_diagonal_(w). When w == 1.0 the label-equality mask already has 1s on
        # the diagonal, so the iota compare is skipped entirely at trace time.
        grow = jax.lax.broadcasted_iota(jnp.int32, (tb, b), 0) + row0
        gcol = jax.lax.broadcasted_iota(jnp.int32, (tb, b), 1)
        mask = jnp.where(grow == gcol, jnp.float32(dir_pos_pair_weight), mask)
    inv_mask_sum = jnp.float32(1.0) / jnp.sum(mask, axis=1, keepdims=True)  # [TB, 1]

    def supcon(anchors, keys_t):
        # keys_t is the pre-transposed [D, B] key matrix -> canonical (1,0) MXU
        # contraction; no per-tile transpose of resident data.
        dots = jax.lax.dot_general(
            anchors, keys_t, (((1,), (0,)), ((), ())),
            preferred_element_type=jnp.float32) * inv_temp               # [TB, B]
        shifted = dots - jnp.max(dots, axis=1, keepdims=True)
        denom = jnp.sum(jnp.exp(shifted), axis=1, keepdims=True) + jnp.float32(1e-6)
        # sum((shifted - log(denom)) * mask) / mask_sum
        #     == sum(shifted * mask) / mask_sum - log(denom)
        # (log folded into the reduction: TB logs, no extra [TB,B] pass/temporary).
        row = (jnp.sum(shifted * mask, axis=1, keepdims=True) * inv_mask_sum
               - jnp.log(denom))
        return jnp.sum(row)                                              # sum over tile anchors

    s1 = supcon(img_anchor, ts_nt_ref[...])   # img anchors vs ts keys
    s2 = supcon(ts_anchor, img_nt_ref[...])   # ts anchors vs img keys

    # scale = lambda_cross_contrast * 0.5 / B ; minus sign from -mean(...).
    out_ref[0, 0] = -(s1 + s2) * jnp.float32(scale)


def _vmem_plan():
    """Generation-aware VMEM limit + tile budget (v7x: 64 MiB/TC, v5e/v6e: 128 MiB)."""
    try:
        cap = int(getattr(pltpu.get_tpu_info(), "vmem_capacity_bytes", 0))
    except Exception:
        cap = 0
    if cap <= 0:
        cap = 64 << 20                                 # conservative (v7x-sized) default
    vmem_limit = min((cap * 3) // 4, 100 << 20)        # ~48 MiB on v7x, ~96 MiB on v5e/v6e
    return vmem_limit, (vmem_limit * 7) // 10          # leave headroom for Mosaic scratch


def _pick_tile(b, d, itemsize, budget):
    """Largest anchor row-tile whose footprint fits; prefer >=2 tiles (v7x has 2 TCs)."""
    resident = 4 * b * d * itemsize + 4 * b + 1024     # keys (+transposed) + labels row
    candidates = [t for t in (512, 256, 128, 64, 32, 16, 8) if t <= b and b % t == 0]
    for need_two_tiles in (True, False):
        for tb in candidates:
            if need_two_tiles and b // tb < 2:
                continue
            foot = (resident
                    + 7 * tb * b * 4                   # [TB,B] f32 temporaries
                    + 2 * tb * d * itemsize            # anchor slices
                    + 2 * tb * 8)                      # labels column (double-buffered)
            if foot <= budget:
                return tb
    return candidates[-1] if candidates else b         # smallest tile / single ragged tile


def _resident_spec(block_shape):
    """Single-buffered BlockSpec for grid-invariant (resident) inputs."""
    index_map = lambda i, _n=len(block_shape): (0,) * _n
    try:
        return pl.BlockSpec(block_shape, index_map, pipeline_mode=pl.Buffered(1))
    except Exception:   # very old jax without pipeline_mode: default double-buffering
        return pl.BlockSpec(block_shape, index_map)


@functools.partial(jax.jit, static_argnames=("matmul_dtype",))
def ahnp_loss(img_proj, ts_proj, ts_logits, labels, matmul_dtype=jnp.bfloat16):
    del ts_logits  # unused by AHNPLoss.forward
    b, d = img_proj.shape
    itemsize = jnp.dtype(matmul_dtype).itemsize
    vmem_limit, budget = _vmem_plan()
    tb = _pick_tile(b, d, itemsize, budget)
    num_tiles = b // tb

    # F.normalize once in the wrapper (single fused XLA pass); the kernel never
    # re-normalizes the resident keys per grid step.
    def l2norm(x):
        x = x.astype(jnp.float32)
        ss = jnp.sum(x * x, axis=-1, keepdims=True)
        return x * jax.lax.rsqrt(jnp.maximum(ss, jnp.float32(1e-24)))

    img_n = l2norm(img_proj).astype(matmul_dtype)       # [B, D] anchors/keys
    ts_n = l2norm(ts_proj).astype(matmul_dtype)
    img_nt = img_n.T                                    # [D, B] pre-transposed keys
    ts_nt = ts_n.T
    labels_col = labels.reshape(b, 1).astype(jnp.int32)
    labels_row = labels.reshape(1, b).astype(jnp.int32)

    kernel = functools.partial(
        _ahnp_tile_kernel,
        temperature=TEMPERATURE,
        dir_pos_pair_weight=DIR_POS_PAIR_WEIGHT,
        scale=float(LAMBDA_CROSS_CONTRAST * 0.5 / b),
    )

    cost = pl.CostEstimate(
        flops=4 * b * b * d,                            # two [B,B]x[B,D] matmuls
        transcendentals=2 * b * b + 2 * b,              # exps + per-row logs
        bytes_accessed=int(4 * b * d * itemsize + 8 * b + 4 * num_tiles),
    )

    partial_losses = pl.pallas_call(
        kernel,
        out_shape=jax.ShapeDtypeStruct((num_tiles, 1), jnp.float32),
        grid=(num_tiles,),
        in_specs=[
            _resident_spec((b, d)),                     # normalized img projections
            _resident_spec((b, d)),                     # normalized ts  projections
            _resident_spec((d, b)),                     # img keys, pre-transposed
            _resident_spec((d, b)),                     # ts  keys, pre-transposed
            pl.BlockSpec((tb, 1), lambda i: (i, 0)),    # labels column tile
            _resident_spec((1, b)),                     # labels row (resident)
        ],
        out_specs=pl.BlockSpec((1, 1), lambda i: (i, 0),
                               memory_space=pltpu.MemorySpace.SMEM),
        compiler_params=pltpu.CompilerParams(
            dimension_semantics=("parallel",),          # v7x: tiles split across both TCs
            vmem_limit_bytes=int(vmem_limit),
        ),
        cost_estimate=cost,
    )(img_n, ts_n, img_nt, ts_nt, labels_col, labels_row)

    return jnp.sum(partial_losses)


def _reference_ahnp_loss(img_proj, ts_proj, labels):
    """Pure-JAX port of the PyTorch module (hard_neg_weights='none' path)."""
    def normalize(x):
        n = jnp.sqrt(jnp.sum(x * x, axis=-1, keepdims=True))
        return x / jnp.maximum(n, 1e-12)

    def crossmodal(a, bproj, lab):
        bsz = a.shape[0]
        lab = lab.reshape(bsz, 1)
        a_n, b_n = normalize(a), normalize(bproj)
        dots = (a_n @ b_n.T) / TEMPERATURE
        dots_stable = dots - jnp.max(dots, axis=1, keepdims=True)
        e = jnp.exp(dots_stable)
        mask = (lab == lab.T).astype(jnp.float32)
        denom = jnp.sum(e, axis=1, keepdims=True) + 1e-06
        log_term = jnp.log(e / denom)
        eye = jnp.eye(bsz, dtype=jnp.float32)
        mask = mask * (1.0 - eye) + eye * DIR_POS_PAIR_WEIGHT
        sum_log = jnp.sum(log_term * mask, axis=1)
        normalized = sum_log / jnp.sum(mask, axis=1)
        return -jnp.mean(normalized)

    l1 = crossmodal(img_proj, ts_proj, labels)
    l2 = crossmodal(ts_proj, img_proj, labels)
    return LAMBDA_CROSS_CONTRAST * 0.5 * (l1 + l2)


if __name__ == "__main__":
    B, D, NUM_CLASSES = 8, 128, 3
    key = jax.random.PRNGKey(0)
    k1, k2, k3, k4 = jax.random.split(key, 4)
    img_proj = jax.random.normal(k1, (B, D), dtype=jnp.float32)
    ts_proj = jax.random.normal(k2, (B, D), dtype=jnp.float32)
    ts_logits = jax.random.normal(k3, (B, NUM_CLASSES), dtype=jnp.float32)  # unused by forward
    labels = jax.random.randint(k4, (B,), 0, NUM_CLASSES, dtype=jnp.int32)

    ref = _reference_ahnp_loss(img_proj, ts_proj, labels)

    # Exact-precision path (f32 MXU): tight check against the PyTorch-equivalent reference.
    loss_f32 = jax.block_until_ready(
        ahnp_loss(img_proj, ts_proj, ts_logits, labels, matmul_dtype=jnp.float32))
    assert jnp.allclose(loss_f32, ref, rtol=1e-5, atol=1e-5), (loss_f32, ref)

    # Default fast path (bf16 MXU matmul, f32 accumulate): looser tolerance.
    loss_bf16 = jax.block_until_ready(ahnp_loss(img_proj, ts_proj, ts_logits, labels))
    assert jnp.allclose(loss_bf16, ref, rtol=2e-2, atol=5e-2), (loss_bf16, ref)

    print("KERNEL_OK")
</pallas_src>

<mosaic_0001>
module attributes {stable_mosaic.version = 11 : i64} {
  func.func @_ahnp_tile_kernel(%arg0: i32, %arg1: memref<8x128xf32, #tpu.memory_space<vmem>>, %arg2: memref<8x128xf32, #tpu.memory_space<vmem>>, %arg3: memref<128x8xf32, #tpu.memory_space<vmem>>, %arg4: memref<128x8xf32, #tpu.memory_space<vmem>>, %arg5: memref<8x1xi32, #tpu.memory_space<vmem>>, %arg6: memref<1x8xi32, #tpu.memory_space<vmem>>, %arg7: memref<1x1xf32, #tpu.memory_space<smem>>) attributes {dimension_semantics = [#tpu.dimension_semantics<parallel>], iteration_bounds = array<i64: 1>, scalar_prefetch = 0 : i64, scratch_operands = 0 : i64, tpu.core_type = #tpu.core_type<tc>, window_params = [{pipeline_mode = #tpu.pipeline_mode<synchronous>, transform_indices = @transform_0, window_bounds = array<i64: 8, 128>}, {pipeline_mode = #tpu.pipeline_mode<synchronous>, transform_indices = @transform_1, window_bounds = array<i64: 8, 128>}, {pipeline_mode = #tpu.pipeline_mode<synchronous>, transform_indices = @transform_2, window_bounds = array<i64: 128, 8>}, {pipeline_mode = #tpu.pipeline_mode<synchronous>, transform_indices = @transform_3, window_bounds = array<i64: 128, 8>}, {transform_indices = @transform_4, window_bounds = array<i64: 8, 1>}, {pipeline_mode = #tpu.pipeline_mode<synchronous>, transform_indices = @transform_5, window_bounds = array<i64: 1, 8>}, {transform_indices = @transform_6, window_bounds = array<i64: 1, 1>}]} {
    %c8_i32 = arith.constant 8 : i32
    %0 = arith.muli %arg0, %c8_i32 : i32
    %1 = tpu.assume_multiple %0, 8 : i32
    %2 = arith.index_cast %1 : i32 to index
    %c0 = arith.constant 0 : index
    %3 = vector.load %arg1[%2, %c0] : memref<8x128xf32, #tpu.memory_space<vmem>>, vector<8x128xf32>
    %4 = arith.index_cast %1 : i32 to index
    %c0_0 = arith.constant 0 : index
    %5 = vector.load %arg2[%4, %c0_0] : memref<8x128xf32, #tpu.memory_space<vmem>>, vector<8x128xf32>
    %c0_1 = arith.constant 0 : index
    %c0_2 = arith.constant 0 : index
    %6 = vector.load %arg5[%c0_1, %c0_2] : memref<8x1xi32, #tpu.memory_space<vmem>>, vector<8x1xi32>
    %c0_3 = arith.constant 0 : index
    %c0_4 = arith.constant 0 : index
    %7 = vector.load %arg6[%c0_3, %c0_4] : memref<1x8xi32, #tpu.memory_space<vmem>>, vector<1x8xi32>
    %8 = vector.broadcast %6 : vector<8x1xi32> to vector<8x8xi32>
    %9 = vector.broadcast %7 : vector<1x8xi32> to vector<8x8xi32>
    %10 = arith.cmpi eq, %8, %9 : vector<8x8xi32>
    %11 = arith.extui %10 : vector<8x8xi1> to vector<8x8xi32>
    %12 = arith.sitofp %11 : vector<8x8xi32> to vector<8x8xf32>
    %cst = arith.constant dense<0.000000e+00> : vector<8xf32>
    %13 = vector.multi_reduction <add>, %12, %cst [1] : vector<8x8xf32> to vector<8xf32>
    %14 = vector.shape_cast %13 : vector<8xf32> to vector<8x1xf32>
    %cst_5 = arith.constant 1.000000e+00 : f32
    %15 = vector.broadcast %cst_5 : f32 to vector<8x1xf32>
    %16 = arith.divf %15, %14 : vector<8x1xf32>
    %c0_6 = arith.constant 0 : index
    %c0_7 = arith.constant 0 : index
    %17 = vector.load %arg4[%c0_6, %c0_7] : memref<128x8xf32, #tpu.memory_space<vmem>>, vector<128x8xf32>
    %cst_8 = arith.constant dense<0.000000e+00> : vector<8x8xf32>
    %18 = tpu.matmul %3, %17, %cst_8 {dimension_numbers = #tpu.dot_dimension_numbers<[1], [0], [0], [1], [0, 0, 1, 1], [], []>} : vector<8x128xf32>, vector<128x8xf32>, vector<8x8xf32> -> vector<8x8xf32>
    %cst_9 = arith.constant 1.000000e+01 : f32
    %19 = vector.broadcast %cst_9 : f32 to vector<8x8xf32>
    %20 = arith.mulf %18, %19 : vector<8x8xf32>
    %cst_10 = arith.constant dense<0xFF800000> : vector<8xf32>
    %21 = vector.multi_reduction <maximumf>, %20, %cst_10 [1] : vector<8x8xf32> to vector<8xf32>
    %22 = vector.shape_cast %21 : vector<8xf32> to vector<8x1xf32>
    %23 = vector.broadcast %22 : vector<8x1xf32> to vector<8x8xf32>
    %24 = arith.subf %20, %23 : vector<8x8xf32>
    %25 = math.exp %24 : vector<8x8xf32>
    %cst_11 = arith.constant dense<0.000000e+00> : vector<8xf32>
    %26 = vector.multi_reduction <add>, %25, %cst_11 [1] : vector<8x8xf32> to vector<8xf32>
    %27 = vector.shape_cast %26 : vector<8xf32> to vector<8x1xf32>
    %cst_12 = arith.constant 9.99999997E-7 : f32
    %28 = vector.broadcast %cst_12 : f32 to vector<8x1xf32>
    %29 = arith.addf %27, %28 : vector<8x1xf32>
    %30 = arith.mulf %24, %12 : vector<8x8xf32>
    %cst_13 = arith.constant dense<0.000000e+00> : vector<8xf32>
    %31 = vector.multi_reduction <add>, %30, %cst_13 [1] : vector<8x8xf32> to vector<8xf32>
    %32 = vector.shape_cast %31 : vector<8xf32> to vector<8x1xf32>
    %33 = arith.mulf %32, %16 : vector<8x1xf32>
    %34 = math.log %29 : vector<8x1xf32>
    %35 = arith.subf %33, %34 : vector<8x1xf32>
    %36 = vector.shape_cast %35 : vector<8x1xf32> to vector<1x8x1xf32>
    %cst_14 = arith.constant dense<0.000000e+00> : vector<1xf32>
    %37 = vector.multi_reduction <add>, %36, %cst_14 [1, 2] : vector<1x8x1xf32> to vector<1xf32>
    %38 = vector.shape_cast %37 : vector<1xf32> to vector<1x1x1xf32>
    %39 = vector.extract %38[0, 0, 0] : f32 from vector<1x1x1xf32>
    %c0_15 = arith.constant 0 : index
    %c0_16 = arith.constant 0 : index
    %40 = vector.load %arg3[%c0_15, %c0_16] : memref<128x8xf32, #tpu.memory_space<vmem>>, vector<128x8xf32>
    %cst_17 = arith.constant dense<0.000000e+00> : vector<8x8xf32>
    %41 = tpu.matmul %5, %40, %cst_17 {dimension_numbers = #tpu.dot_dimension_numbers<[1], [0], [0], [1], [0, 0, 1, 1], [], []>} : vector<8x128xf32>, vector<128x8xf32>, vector<8x8xf32> -> vector<8x8xf32>
    %cst_18 = arith.constant 1.000000e+01 : f32
    %42 = vector.broadcast %cst_18 : f32 to vector<8x8xf32>
    %43 = arith.mulf %41, %42 : vector<8x8xf32>
    %cst_19 = arith.constant dense<0xFF800000> : vector<8xf32>
    %44 = vector.multi_reduction <maximumf>, %43, %cst_19 [1] : vector<8x8xf32> to vector<8xf32>
    %45 = vector.shape_cast %44 : vector<8xf32> to vector<8x1xf32>
    %46 = vector.broadcast %45 : vector<8x1xf32> to vector<8x8xf32>
    %47 = arith.subf %43, %46 : vector<8x8xf32>
    %48 = math.exp %47 : vector<8x8xf32>
    %cst_20 = arith.constant dense<0.000000e+00> : vector<8xf32>
    %49 = vector.multi_reduction <add>, %48, %cst_20 [1] : vector<8x8xf32> to vector<8xf32>
    %50 = vector.shape_cast %49 : vector<8xf32> to vector<8x1xf32>
    %cst_21 = arith.constant 9.99999997E-7 : f32
    %51 = vector.broadcast %cst_21 : f32 to vector<8x1xf32>
    %52 = arith.addf %50, %51 : vector<8x1xf32>
    %53 = arith.mulf %47, %12 : vector<8x8xf32>
    %cst_22 = arith.constant dense<0.000000e+00> : vector<8xf32>
    %54 = vector.multi_reduction <add>, %53, %cst_22 [1] : vector<8x8xf32> to vector<8xf32>
    %55 = vector.shape_cast %54 : vector<8xf32> to vector<8x1xf32>
    %56 = arith.mulf %55, %16 : vector<8x1xf32>
    %57 = math.log %52 : vector<8x1xf32>
    %58 = arith.subf %56, %57 : vector<8x1xf32>
    %59 = vector.shape_cast %58 : vector<8x1xf32> to vector<1x8x1xf32>
    %cst_23 = arith.constant dense<0.000000e+00> : vector<1xf32>
    %60 = vector.multi_reduction <add>, %59, %cst_23 [1, 2] : vector<1x8x1xf32> to vector<1xf32>
    %61 = vector.shape_cast %60 : vector<1xf32> to vector<1x1x1xf32>
    %62 = vector.extract %61[0, 0, 0] : f32 from vector<1x1x1xf32>
    %63 = arith.addf %39, %62 : f32
    %cst_24 = arith.constant 0.000000e+00 : f32
    %64 = arith.subf %cst_24, %63 : f32
    %cst_25 = arith.constant 6.250000e-02 : f32
    %65 = arith.mulf %64, %cst_25 : f32
    %c0_26 = arith.constant 0 : index
    %c0_27 = arith.constant 0 : index
    %66 = memref.load %arg7[%c0_26, %c0_27] : memref<1x1xf32, #tpu.memory_space<smem>>
    memref.store %65, %arg7[%c0_26, %c0_27] : memref<1x1xf32, #tpu.memory_space<smem>>
    return
  }
  func.func @transform_0(%arg0: i32) -> (i32, i32) {
    %c0_i32 = arith.constant 0 : i32
    %c0_i32_0 = arith.constant 0 : i32
    %c0_i32_1 = arith.constant 0 : i32
    return %c0_i32, %c0_i32_0 : i32, i32
  }
  func.func @transform_1(%arg0: i32) -> (i32, i32) {
    %c0_i32 = arith.constant 0 : i32
    %c0_i32_0 = arith.constant 0 : i32
    %c0_i32_1 = arith.constant 0 : i32
    return %c0_i32, %c0_i32_0 : i32, i32
  }
  func.func @transform_2(%arg0: i32) -> (i32, i32) {
    %c0_i32 = arith.constant 0 : i32
    %c0_i32_0 = arith.constant 0 : i32
    %c0_i32_1 = arith.constant 0 : i32
    return %c0_i32, %c0_i32_0 : i32, i32
  }
  func.func @transform_3(%arg0: i32) -> (i32, i32) {
    %c0_i32 = arith.constant 0 : i32
    %c0_i32_0 = arith.constant 0 : i32
    %c0_i32_1 = arith.constant 0 : i32
    return %c0_i32, %c0_i32_0 : i32, i32
  }
  func.func @transform_4(%arg0: i32) -> (i32, i32) {
    %c0_i32 = arith.constant 0 : i32
    %c0_i32_0 = arith.constant 0 : i32
    return %arg0, %c0_i32 : i32, i32
  }
  func.func @transform_5(%arg0: i32) -> (i32, i32) {
    %c0_i32 = arith.constant 0 : i32
    %c0_i32_0 = arith.constant 0 : i32
    %c0_i32_1 = arith.constant 0 : i32
    return %c0_i32, %c0_i32_0 : i32, i32
  }
  func.func @transform_6(%arg0: i32) -> (i32, i32) {
    %c0_i32 = arith.constant 0 : i32
    %c0_i32_0 = arith.constant 0 : i32
    return %arg0, %c0_i32 : i32, i32
  }
}

</mosaic_0001>

<llo_original>
// kernel: ahnp_loss.1
$region0: #{ahnp_loss.1}
  #allocation0 [shape = 'u32[]', space=smem, size = 0x4, offset = 0x4, fixed_abs, tag = 'smem constant byte address 0x4 - core index']
  #allocation1 [shape = 'u32[144,128]{1,0:T(1,128)}', space=vmem, size = 0x12000, scoped, tag = 'internal scratch']
  %s0 = inlined_call_operand.vmem [shape: f32[8,128], index: 0, kind: input, shape index: {}]
  %s1 = inlined_call_operand.vmem [shape: f32[8,128], index: 1, kind: input, shape index: {}]
  %s2 = inlined_call_operand.vmem [shape: f32[128,8], index: 2, kind: input, shape index: {}]
  %s3 = inlined_call_operand.vmem [shape: f32[128,8], index: 3, kind: input, shape index: {}]
  %s4 = inlined_call_operand.vmem [shape: s32[8,1], index: 4, kind: input, shape index: {}]
  %s5 = inlined_call_operand.vmem [shape: s32[1,8], index: 5, kind: input, shape index: {}]
  %s6 = inlined_call_operand.hbm [shape: f32[1,1], index: 6, kind: output, shape index: {}]
  %s7 = sld [smem:[#allocation0]]
  $region34: #{ahnp_loss.1} parent=0
    _
  %s9 = ssub.s32 1, %s7
  %s10 = scalar_select 0, %s9, %s7
  $region1: #{ahnp_loss.1} parent=0
    #allocation2 [shape = 'u8[512]{0}', space=smem, size = 0x200, scoped, tag = 'output window, operand 0, single buffered']
    #allocation3 [shape = 's32[1]{0}', space=sflag, size = 0x4, scoped, tag = 'scoped memory for ahnp_loss.1']
    %11 = vsyncpa [#allocation3], 0
    // Predicated region
    $region2: #{ahnp_loss.1} parent=1 // pred_check
      _
    $region3: #{ahnp_loss.1} parent=1 // pred_check_branch
      %13 = sbr.rel (0) target = $region5
    $region4: #{ahnp_loss.1} parent=1 // pred_region
      _
    $region5: #{ahnp_loss.1} parent=1 // pred_fallthru
      _
    // Predicated region
    $region6: #{ahnp_loss.1} parent=1 // pred_check
      _
    $region7: #{ahnp_loss.1} parent=1 // pred_check_branch
      %15 = sbr.rel (0) target = $region9
    $region8: #{ahnp_loss.1} parent=1 // pred_region
      _
    $region9: #{ahnp_loss.1} parent=1 // pred_fallthru
      _
    // Predicated region
    $region10: #{ahnp_loss.1} parent=1 // pred_check
      _
    $region11: #{ahnp_loss.1} parent=1 // pred_check_branch
      %17 = sbr.rel (0) target = $region13
    $region12: #{ahnp_loss.1} parent=1 // pred_region
      _
    $region13: #{ahnp_loss.1} parent=1 // pred_fallthru
      _
    // Predicated region
    $region14: #{ahnp_loss.1} parent=1 // pred_check
      _
    $region15: #{ahnp_loss.1} parent=1 // pred_check_branch
      %19 = sbr.rel (0) target = $region17
    $region16: #{ahnp_loss.1} parent=1 // pred_region
      _
    $region17: #{ahnp_loss.1} parent=1 // pred_fallthru
      _
    // Predicated region
    $region18: #{ahnp_loss.1} parent=1 // pred_check
      _
    $region19: #{ahnp_loss.1} parent=1 // pred_check_branch
      %21 = sbr.rel (0) target = $region21
    $region20: #{ahnp_loss.1} parent=1 // pred_region
      _
    $region21: #{ahnp_loss.1} parent=1 // pred_fallthru
      _
    // Predicated region
    $region22: #{ahnp_loss.1} parent=1 // pred_check
      _
    $region23: #{ahnp_loss.1} parent=1 // pred_check_branch
      %23 = sbr.rel (0) target = $region25
    $region24: #{ahnp_loss.1} parent=1 // pred_region
      _
    $region25: #{ahnp_loss.1} parent=1 // pred_fallthru
      _
    %s24 = smul.u32 0, 8
    %s25 = scalar_lea.vmem %s0, %s24
    %v26 = vld [vmem:[%s25] sm:$0xff]
    %s27 = scalar_lea.vmem %s1, %s24
    %v28 = vld [vmem:[%s27] sm:$0xff]
    %v29 = vld [vmem:[%s4] sm:$0xff]
    %v30 = vld [vmem:[%s5] sm:$0x1]
    %31 = vset.pattern.permute.xlu0 0
    %32 = vperm.xlu0 %31, %v29
    %v33 = vpop.permute.xlu0 %32
    %v34 = vlaneseq
    %v35 = vshrl.u32 %v34, 7
    %v36 = vsub.s32 0, %v35
    %v37 = vrot.slane %v30, %v36
    %vm38 = vcmp.eq.s32.totalorder %v33, %v37
    %v39 = vsel %vm38, 1, 0
    %v40 = vcvt.s32.f32 %v39
    %vm41 = vcmask 64512
    %v42 = vsel %vm41, %v40, 0.0
    %43 = vadd.xlane.f32.xlu0 %v42
    %v44 = vpop.xlane.xlu0 %43
    %v45 = vrcp.pop %v44
    %v46 = vmul.f32 1.0, %v45
    %v47 = vld [vmem:[%s3] sm:$0xff]
    %v48 = vld [vmem:[%s3 + $0x8] sm:$0xff]
    %v49 = vld [vmem:[%s3 + $0x10] sm:$0xff]
    %v50 = vld [vmem:[%s3 + $0x18] sm:$0xff]
    %v51 = vld [vmem:[%s3 + $0x20] sm:$0xff]
    %v52 = vld [vmem:[%s3 + $0x28] sm:$0xff]
    %v53 = vld [vmem:[%s3 + $0x30] sm:$0xff]
    %v54 = vld [vmem:[%s3 + $0x38] sm:$0xff]
    %v55 = vld [vmem:[%s3 + $0x40] sm:$0xff]
    %v56 = vld [vmem:[%s3 + $0x48] sm:$0xff]
    %v57 = vld [vmem:[%s3 + $0x50] sm:$0xff]
    %v58 = vld [vmem:[%s3 + $0x58] sm:$0xff]
    %v59 = vld [vmem:[%s3 + $0x60] sm:$0xff]
    %v60 = vld [vmem:[%s3 + $0x68] sm:$0xff]
    %v61 = vld [vmem:[%s3 + $0x70] sm:$0xff]
    %v62 = vld [vmem:[%s3 + $0x78] sm:$0xff]
    %63 = vmatprep.subr.mxu0 0.0
    %64 = vmatpush1.msra.mxu0 %v47
    %65 = vmatprep.subr.mxu0 0.0
    %66 = vmatpush1.msra.mxu0 %v48
    %67 = vmatprep.subr.mxu0 0.0
    %68 = vmatpush1.msra.mxu0 %v49
    %69 = vmatprep.subr.mxu0 0.0
    %70 = vmatpush1.msra.mxu0 %v50
    %71 = vmatprep.subr.mxu0 0.0
    %72 = vmatpush1.msra.mxu0 %v51
    %73 = vmatprep.subr.mxu0 0.0
    %74 = vmatpush1.msra.mxu0 %v52
    %75 = vmatprep.subr.mxu0 0.0
    %76 = vmatpush1.msra.mxu0 %v53
    %77 = vmatprep.subr.mxu0 0.0
    %78 = vmatpush1.msra.mxu0 %v54
    %79 = vmatprep.subr.mxu0 0.0
    %80 = vmatpush1.msra.mxu0 %v55
    %81 = vmatprep.subr.mxu0 0.0
    %82 = vmatpush1.msra.mxu0 %v56
    %83 = vmatprep.subr.mxu0 0.0
    %84 = vmatpush1.msra.mxu0 %v57
    %85 = vmatprep.subr.mxu0 0.0
    %86 = vmatpush1.msra.mxu0 %v58
    %87 = vmatprep.subr.mxu0 0.0
    %88 = vmatpush1.msra.mxu0 %v59
    %89 = vmatprep.subr.mxu0 0.0
    %90 = vmatpush1.msra.mxu0 %v60
    %91 = vmatprep.subr.mxu0 0.0
    %92 = vmatpush1.msra.mxu0 %v61
    %93 = vmatprep.subr.mxu0 0.0
    %94 = vmatpush1.msra.mxu0 %v62
    %95 = vmatprep.subr.mxu0 0.0
    %96 = vmatpush1.msra.mxu0 0.0
    %97 = vmatprep.subr.mxu0 0.0
    %98 = vmatpush1.msra.mxu0 0.0
    %99 = vmatprep.subr.mxu0 0.0
    %100 = vmatpush1.msra.mxu0 0.0
    %101 = vmatprep.subr.mxu0 0.0
    %102 = vmatpush1.msra.mxu0 0.0
    %103 = vmatprep.subr.mxu0 0.0
    %104 = vmatpush1.msra.mxu0 0.0
    %105 = vmatprep.subr.mxu0 0.0
    %106 = vmatpush1.msra.mxu0 0.0
    %107 = vmatprep.subr.mxu0 0.0
    %108 = vmatpush1.msra.mxu0 0.0
    %109 = vmatprep.subr.mxu0 0.0
    %110 = vmatpush1.msra.mxu0 0.0
    %111 = vmatprep.subr.mxu0 0.0
    %112 = vmatpush1.msra.mxu0 0.0
    %113 = vmatprep.subr.mxu0 0.0
    %114 = vmatpush1.msra.mxu0 0.0
    %115 = vmatprep.subr.mxu0 0.0
    %116 = vmatpush1.msra.mxu0 0.0
    %117 = vmatprep.subr.mxu0 0.0
    %118 = vmatpush1.msra.mxu0 0.0
    %119 = vmatprep.subr.mxu0 0.0
    %120 = vmatpush1.msra.mxu0 0.0
    %121 = vmatprep.subr.mxu0 0.0
    %122 = vmatpush1.msra.mxu0 0.0
    %123 = vmatprep.subr.mxu0 0.0
    %124 = vmatpush1.msra.mxu0 0.0
    %125 = vmatprep.subr.mxu0 0.0
    %126 = vmatpush1.msra.mxu0 0.0
    %127 = vmatprep.mubr.f32.mxu0 0.0
    %128 = vmatmul.mubr.f32.gmra.mrb[0].mxu0 %v26
    %v129 = vpop.f32.mrb[0].mxu0
    %v130 = vadd.f32 0.0, %v129
    %v131 = vpop.f32.mrb[0].mxu0
    %132 = vdwg.mxu0
    %v133 = vmul.f32 %v130, 10.0
    %v134 = vsel %vm41, %v133, -inf
    %135 = vmax.xlane.f32.xlu0 %v134
    %v136 = vpop.xlane.xlu0 %135
    %v137 = vsub.f32 %v133, %v136
    %v138 = vmul.f32 %v137, 1.442695
    %v139 = vpow.pop %v138
    %v140 = vsel %vm41, %v139, 0.0
    %141 = vadd.xlane.f32.xlu0 %v140
    %v142 = vpop.xlane.xlu0 %141
    %v143 = vadd.f32 %v142, 1e-06
    %v144 = vmul.f32 %v137, %v40
    %v145 = vsel %vm41, %v144, 0.0
    %146 = vadd.xlane.f32.xlu0 %v145
    %v147 = vpop.xlane.xlu0 %146
    %v148 = vmul.f32 %v147, %v46
    %v149 = vlog2.pop %v143
    %v150 = vmul.f32 %v149, 0.6931472
    %v151 = vsub.f32 %v148, %v150
    %vm152 = vcmask 7168
    %v153 = vsel %vm152, %v151, 0.0
    %154 = vadd.xlane.f32.xlu0 %v153
    %v155 = vpop.xlane.xlu0 %154
    %v156 = vrot.slane %v155, 4
    %v157 = vadd.f32 %v155, %v156
    %v158 = vrot.slane %v157, 2
    %v159 = vadd.f32 %v157, %v158
    %v160 = vrot.slane %v159, 1
    %v161 = vadd.f32 %v159, %v160
    %s162 = vtos %v161
    %v163 = vld [vmem:[%s2] sm:$0xff]
    %v164 = vld [vmem:[%s2 + $0x8] sm:$0xff]
    %v165 = vld [vmem:[%s2 + $0x10] sm:$0xff]
    %v166 = vld [vmem:[%s2 + $0x18] sm:$0xff]
    %v167 = vld [vmem:[%s2 + $0x20] sm:$0xff]
    %v168 = vld [vmem:[%s2 + $0x28] sm:$0xff]
    %v169 = vld [vmem:[%s2 + $0x30] sm:$0xff]
    %v170 = vld [vmem:[%s2 + $0x38] sm:$0xff]
    %v171 = vld [vmem:[%s2 + $0x40] sm:$0xff]
    %v172 = vld [vmem:[%s2 + $0x48] sm:$0xff]
    %v173 = vld [vmem:[%s2 + $0x50] sm:$0xff]
    %v174 = vld [vmem:[%s2 + $0x58] sm:$0xff]
    %v175 = vld [vmem:[%s2 + $0x60] sm:$0xff]
    %v176 = vld [vmem:[%s2 + $0x68] sm:$0xff]
    %v177 = vld [vmem:[%s2 + $0x70] sm:$0xff]
    %v178 = vld [vmem:[%s2 + $0x78] sm:$0xff]
    %179 = vmatprep.subr.mxu0 0.0
    %180 = vmatpush1.msra.mxu0 %v163
    %181 = vmatprep.subr.mxu0 0.0
    %182 = vmatpush1.msra.mxu0 %v164
    %183 = vmatprep.subr.mxu0 0.0
    %184 = vmatpush1.msra.mxu0 %v165
    %185 = vmatprep.subr.mxu0 0.0
    %186 = vmatpush1.msra.mxu0 %v166
    %187 = vmatprep.subr.mxu0 0.0
    %188 = vmatpush1.msra.mxu0 %v167
    %189 = vmatprep.subr.mxu0 0.0
    %190 = vmatpush1.msra.mxu0 %v168
    %191 = vmatprep.subr.mxu0 0.0
    %192 = vmatpush1.msra.mxu0 %v169
    %193 = vmatprep.subr.mxu0 0.0
    %194 = vmatpush1.msra.mxu0 %v170
    %195 = vmatprep.subr.mxu0 0.0
    %196 = vmatpush1.msra.mxu0 %v171
    %197 = vmatprep.subr.mxu0 0.0
    %198 = vmatpush1.msra.mxu0 %v172
    %199 = vmatprep.subr.mxu0 0.0
    %200 = vmatpush1.msra.mxu0 %v173
    %201 = vmatprep.subr.mxu0 0.0
    %202 = vmatpush1.msra.mxu0 %v174
    %203 = vmatprep.subr.mxu0 0.0
    %204 = vmatpush1.msra.mxu0 %v175
    %205 = vmatprep.subr.mxu0 0.0
    %206 = vmatpush1.msra.mxu0 %v176
    %207 = vmatprep.subr.mxu0 0.0
    %208 = vmatpush1.msra.mxu0 %v177
    %209 = vmatprep.subr.mxu0 0.0
    %210 = vmatpush1.msra.mxu0 %v178
    %211 = vmatprep.subr.mxu0 0.0
    %212 = vmatpush1.msra.mxu0 0.0
    %213 = vmatprep.subr.mxu0 0.0
    %214 = vmatpush1.msra.mxu0 0.0
    %215 = vmatprep.subr.mxu0 0.0
    %216 = vmatpush1.msra.mxu0 0.0
    %217 = vmatprep.subr.mxu0 0.0
    %218 = vmatpush1.msra.mxu0 0.0
    %219 = vmatprep.subr.mxu0 0.0
    %220 = vmatpush1.msra.mxu0 0.0
    %221 = vmatprep.subr.mxu0 0.0
    %222 = vmatpush1.msra.mxu0 0.0
    %223 = vmatprep.subr.mxu0 0.0
    %224 = vmatpush1.msra.mxu0 0.0
    %225 = vmatprep.subr.mxu0 0.0
    %226 = vmatpush1.msra.mxu0 0.0
    %227 = vmatprep.subr.mxu0 0.0
    %228 = vmatpush1.msra.mxu0 0.0
    %229 = vmatprep.subr.mxu0 0.0
    %230 = vmatpush1.msra.mxu0 0.0
    %231 = vmatprep.subr.mxu0 0.0
    %232 = vmatpush1.msra.mxu0 0.0
    %233 = vmatprep.subr.mxu0 0.0
    %234 = vmatpush1.msra.mxu0 0.0
    %235 = vmatprep.subr.mxu0 0.0
    %236 = vmatpush1.msra.mxu0 0.0
    %237 = vmatprep.subr.mxu0 0.0
    %238 = vmatpush1.msra.mxu0 0.0
    %239 = vmatprep.subr.mxu0 0.0
    %240 = vmatpush1.msra.mxu0 0.0
    %241 = vmatprep.subr.mxu0 0.0
    %242 = vmatpush1.msra.mxu0 0.0
    %243 = vmatprep.mubr.f32.mxu0 0.0
    %244 = vmatmul.mubr.f32.gmra.mrb[0].mxu0 %v28
    %v245 = vpop.f32.mrb[0].mxu0
    %v246 = vadd.f32 0.0, %v245
    %v247 = vpop.f32.mrb[0].mxu0
    %248 = vdwg.mxu0
    %v249 = vmul.f32 %v246, 10.0
    %v250 = vsel %vm41, %v249, -inf
    %251 = vmax.xlane.f32.xlu0 %v250
    %v252 = vpop.xlane.xlu0 %251
    %v253 = vsub.f32 %v249, %v252
    %v254 = vmul.f32 %v253, 1.442695
    %v255 = vpow.pop %v254
    %v256 = vsel %vm41, %v255, 0.0
    %257 = vadd.xlane.f32.xlu0 %v256
    %v258 = vpop.xlane.xlu0 %257
    %v259 = vadd.f32 %v258, 1e-06
    %v260 = vmul.f32 %v253, %v40
    %v261 = vsel %vm41, %v260, 0.0
    %262 = vadd.xlane.f32.xlu0 %v261
    %v263 = vpop.xlane.xlu0 %262
    %v264 = vmul.f32 %v263, %v46
    %v265 = vlog2.pop %v259
    %v266 = vmul.f32 %v265, 0.6931472
    %v267 = vsub.f32 %v264, %v266
    %v268 = vsel %vm152, %v267, 0.0
    %269 = vadd.xlane.f32.xlu0 %v268
    %v270 = vpop.xlane.xlu0 %269
    %v271 = vrot.slane %v270, 4
    %v272 = vadd.f32 %v270, %v271
    %v273 = vrot.slane %v272, 2
    %v274 = vadd.f32 %v272, %v273
    %v275 = vrot.slane %v274, 1
    %v276 = vadd.f32 %v274, %v275
    %s277 = vtos %v276
    %s278 = sadd.f32 %s162, %s277
    %s279 = ssub.f32 0.0, %s278
    %s280 = smul.f32 %s279, 0.0625
    %s281 = scalar_lea.smem [#allocation2], 0
    %282 = sst [smem:[%s281]] %s280
    // Predicated region
    $region26: #{ahnp_loss.1} parent=1 // pred_check
      _
    $region27: #{ahnp_loss.1} parent=1 // pred_check_branch
      %284 = sbr.rel (0) target = $region29
    $region28: #{ahnp_loss.1} parent=1 // pred_region
      %s286 = ssub.s32 16, 16
      %287 = vsyncadd [#allocation3], %s286
      %290 = dma.smem_to_hbm [#allocation2], 16, %s6, [#allocation3]
    $region29: #{ahnp_loss.1} parent=1 // pred_fallthru
      _
    // Predicated region
    $region30: #{ahnp_loss.1} parent=1 // pred_check
      _
    $region31: #{ahnp_loss.1} parent=1 // pred_check_branch
      %292 = sbr.rel (0) target = $region33
    $region32: #{ahnp_loss.1} parent=1 // pred_region
      %293 = dma.done [#allocation3], 16
    $region33: #{ahnp_loss.1} parent=1 // pred_fallthru
      _
    %294 = sfence
    %295 = vsyncpa [#allocation3], 1

</llo_original>
